<compile_context>
chip_gen: v5e
topology: v5e:2x2
jax: 0.10.0
libtpu: 0.0.40
codegen_flags: <defaults>
</compile_context>

<pallas_src>
import functools

import jax
import jax.numpy as jnp
from jax.experimental import pallas as pl
from jax.experimental.pallas import tpu as pltpu

_LANE = 128


def _fused_mlp_kernel(*refs, num_layers, matmul_dtype):
    """refs = (xT_ref, w1_ref, b1_ref, ..., wN_ref, bN_ref, oT_ref).

    Feature-major layout: activations are (features, batch_tile); layer i is
    act = sigmoid(W_i @ act + b_i) with W_i stored (out, in) like nn.Linear.
    Hidden layers use sigmoid; the last layer applies softmax over the class
    axis (axis 0 here == dim=1 of the row-major PyTorch output).
    """
    x_ref = refs[0]
    o_ref = refs[-1]
    wb_refs = refs[1:-1]

    act = x_ref[...]                                       # (D_in, B_tile)
    for i in range(num_layers):
        w = wb_refs[2 * i][...]                            # (D_out_i, D_in_i)
        b = wb_refs[2 * i + 1][...]                        # (D_out_i, 1) f32
        y = jnp.dot(w.astype(matmul_dtype), act.astype(matmul_dtype),
                    preferred_element_type=jnp.float32) + b
        if i < num_layers - 1:
            act = jax.nn.sigmoid(y)                        # f32
        else:
            # F.softmax over the class axis, numerically stable, exact
            # normalization (no approx reciprocal -> rows sum to 1).
            y = y - jnp.max(y, axis=0, keepdims=True)
            e = jnp.exp(y)
            act = e / jnp.sum(e, axis=0, keepdims=True)
    o_ref[...] = act.astype(o_ref.dtype)


def init_params(layers, key):
    """Matches dirichlet_net.init_values: weight, bias ~ Normal(0, 1).

    Weights stored (out_dim, in_dim) exactly like torch.nn.Linear; biases as
    (out_dim, 1) columns for the feature-major kernel layout.
    """
    params = []
    for i in range(1, len(layers)):
        key, kw, kb = jax.random.split(key, 3)
        w = jax.random.normal(kw, (layers[i], layers[i - 1]), dtype=jnp.float32)
        b = jax.random.normal(kb, (layers[i], 1), dtype=jnp.float32)
        params.append((w, b))
    return params


def dirichlet_net_forward(params, x, *, batch_tile=32768, use_bf16=False):
    """x: (B, D_in) row-major.  Returns (B, num_classes), same as PyTorch.

    Internally runs feature-major: x is transposed once to (D_in, B) and
    zero-padded to a multiple of the batch tile (padding sliced off at the
    end).  batch_tile is sweepable (16K-64K recommended); it is forced to a
    multiple of 128 lanes.
    """
    num_layers = len(params)
    B, D_in = x.shape
    D_out = params[-1][0].shape[0]
    matmul_dtype = jnp.bfloat16 if use_bf16 else jnp.float32

    # Batch tile: multiple of 128 lanes, never bigger than needed for B.
    batch_tile = max(_LANE, (batch_tile // _LANE) * _LANE)
    tile = min(batch_tile, pl.cdiv(B, _LANE) * _LANE)
    b_padded = pl.cdiv(B, tile) * tile

    # NOTE: if the caller can store x feature-major up front, this transpose
    # (one extra pass over x in XLA) disappears.
    xT = x.T                                               # (D_in, B)
    if b_padded != B:
        xT = jnp.pad(xT, ((0, 0), (0, b_padded - B)))

    flat_inputs = [xT.astype(matmul_dtype)]
    in_specs = [pl.BlockSpec((D_in, tile), lambda i: (0, i))]
    for w, b in params:
        flat_inputs.append(w.astype(matmul_dtype))
        flat_inputs.append(b)                              # bias stays f32
        in_specs.append(pl.BlockSpec(w.shape, lambda i: (0, 0)))
        in_specs.append(pl.BlockSpec(b.shape, lambda i: (0, 0)))

    kernel = functools.partial(_fused_mlp_kernel, num_layers=num_layers,
                               matmul_dtype=matmul_dtype)

    outT = pl.pallas_call(
        kernel,
        out_shape=jax.ShapeDtypeStruct((D_out, b_padded), jnp.float32),
        grid=(b_padded // tile,),
        in_specs=in_specs,
        out_specs=pl.BlockSpec((D_out, tile), lambda i: (0, i)),
        compiler_params=pltpu.CompilerParams(
            dimension_semantics=("parallel",),
            # Large batch tiles exceed v5e's 16 MiB scoped default; 48 MiB
            # stays under v7x's 64 MiB physical VMEM.
            vmem_limit_bytes=48 * 1024 * 1024,
        ),
    )(*flat_inputs)

    # Back to the PyTorch row-major convention; drop padded batch columns.
    return outT[:, :B].T


if __name__ == "__main__":
    # layers = [input_dim, hidden, hidden, num_classes]
    layers = [16, 32, 32, 4]
    batch = 8

    key = jax.random.PRNGKey(0)
    key, kx = jax.random.split(key)
    x = jax.random.normal(kx, (batch, layers[0]), dtype=jnp.float32)
    params = init_params(layers, key)

    out = jax.block_until_ready(dirichlet_net_forward(params, x))

    # Plain-JAX reference (full-precision matmuls), same semantics.
    hp = jax.lax.Precision.HIGHEST
    ref = x
    for w, b in params[:-1]:
        ref = jax.nn.sigmoid(jnp.dot(ref, w.T, precision=hp) + b[:, 0])
    w, b = params[-1]
    logits = jnp.dot(ref, w.T, precision=hp) + b[:, 0]
    logits = logits - jnp.max(logits, axis=1, keepdims=True)
    e = jnp.exp(logits)
    ref = e / jnp.sum(e, axis=1, keepdims=True)

    assert out.shape == (batch, layers[-1])
    row_sums = jnp.sum(out, axis=1)
    assert jnp.allclose(row_sums, jnp.ones_like(row_sums), atol=1e-5)
    assert jnp.allclose(out, ref, atol=1e-4)

    # bf16 fast path (v6e/v7x HBM saving): f32 accumulate + f32 softmax,
    # checked with loose tolerance appropriate to bf16 inputs.
    out_bf16 = jax.block_until_ready(
        dirichlet_net_forward(params, x, use_bf16=True))
    assert out_bf16.shape == (batch, layers[-1])
    rs_bf16 = jnp.sum(out_bf16, axis=1)
    assert jnp.allclose(rs_bf16, jnp.ones_like(rs_bf16), atol=1e-4)
    assert jnp.allclose(out_bf16, ref, atol=1e-1)

    print("KERNEL_OK")
</pallas_src>

<mosaic_0001>
module attributes {stable_mosaic.version = 11 : i64} {
  func.func @_fused_mlp_kernel(%arg0: i32, %arg1: memref<16x128xf32, #tpu.memory_space<vmem>>, %arg2: memref<32x16xf32, #tpu.memory_space<vmem>>, %arg3: memref<32x1xf32, #tpu.memory_space<vmem>>, %arg4: memref<32x32xf32, #tpu.memory_space<vmem>>, %arg5: memref<32x1xf32, #tpu.memory_space<vmem>>, %arg6: memref<4x32xf32, #tpu.memory_space<vmem>>, %arg7: memref<4x1xf32, #tpu.memory_space<vmem>>, %arg8: memref<4x128xf32, #tpu.memory_space<vmem>>) attributes {dimension_semantics = [#tpu.dimension_semantics<parallel>], iteration_bounds = array<i64: 1>, scalar_prefetch = 0 : i64, scratch_operands = 0 : i64, tpu.core_type = #tpu.core_type<tc>, window_params = [{transform_indices = @transform_0, window_bounds = array<i64: 16, 128>}, {pipeline_mode = #tpu.pipeline_mode<synchronous>, transform_indices = @transform_1, window_bounds = array<i64: 32, 16>}, {pipeline_mode = #tpu.pipeline_mode<synchronous>, transform_indices = @transform_2, window_bounds = array<i64: 32, 1>}, {pipeline_mode = #tpu.pipeline_mode<synchronous>, transform_indices = @transform_3, window_bounds = array<i64: 32, 32>}, {pipeline_mode = #tpu.pipeline_mode<synchronous>, transform_indices = @transform_4, window_bounds = array<i64: 32, 1>}, {pipeline_mode = #tpu.pipeline_mode<synchronous>, transform_indices = @transform_5, window_bounds = array<i64: 4, 32>}, {pipeline_mode = #tpu.pipeline_mode<synchronous>, transform_indices = @transform_6, window_bounds = array<i64: 4, 1>}, {transform_indices = @transform_7, window_bounds = array<i64: 4, 128>}]} {
    %c0 = arith.constant 0 : index
    %c0_0 = arith.constant 0 : index
    %0 = vector.load %arg1[%c0, %c0_0] : memref<16x128xf32, #tpu.memory_space<vmem>>, vector<16x128xf32>
    %c0_1 = arith.constant 0 : index
    %c0_2 = arith.constant 0 : index
    %1 = vector.load %arg2[%c0_1, %c0_2] : memref<32x16xf32, #tpu.memory_space<vmem>>, vector<32x16xf32>
    %c0_3 = arith.constant 0 : index
    %c0_4 = arith.constant 0 : index
    %2 = vector.load %arg3[%c0_3, %c0_4] : memref<32x1xf32, #tpu.memory_space<vmem>>, vector<32x1xf32>
    %cst = arith.constant dense<0.000000e+00> : vector<32x128xf32>
    %3 = tpu.matmul %1, %0, %cst {dimension_numbers = #tpu.dot_dimension_numbers<[1], [0], [0], [1], [0, 0, 1, 1], [], []>} : vector<32x16xf32>, vector<16x128xf32>, vector<32x128xf32> -> vector<32x128xf32>
    %4 = vector.broadcast %2 : vector<32x1xf32> to vector<32x128xf32>
    %5 = arith.addf %3, %4 : vector<32x128xf32>
    %6 = arith.negf %5 : vector<32x128xf32>
    %7 = math.exp %6 : vector<32x128xf32>
    %cst_5 = arith.constant 1.000000e+00 : f32
    %8 = vector.broadcast %cst_5 : f32 to vector<32x128xf32>
    %9 = arith.addf %8, %7 : vector<32x128xf32>
    %10 = arith.divf %8, %9 : vector<32x128xf32>
    %c0_6 = arith.constant 0 : index
    %c0_7 = arith.constant 0 : index
    %11 = vector.load %arg4[%c0_6, %c0_7] : memref<32x32xf32, #tpu.memory_space<vmem>>, vector<32x32xf32>
    %c0_8 = arith.constant 0 : index
    %c0_9 = arith.constant 0 : index
    %12 = vector.load %arg5[%c0_8, %c0_9] : memref<32x1xf32, #tpu.memory_space<vmem>>, vector<32x1xf32>
    %cst_10 = arith.constant dense<0.000000e+00> : vector<32x128xf32>
    %13 = tpu.matmul %11, %10, %cst_10 {dimension_numbers = #tpu.dot_dimension_numbers<[1], [0], [0], [1], [0, 0, 1, 1], [], []>} : vector<32x32xf32>, vector<32x128xf32>, vector<32x128xf32> -> vector<32x128xf32>
    %14 = vector.broadcast %12 : vector<32x1xf32> to vector<32x128xf32>
    %15 = arith.addf %13, %14 : vector<32x128xf32>
    %16 = arith.negf %15 : vector<32x128xf32>
    %17 = math.exp %16 : vector<32x128xf32>
    %cst_11 = arith.constant 1.000000e+00 : f32
    %18 = vector.broadcast %cst_11 : f32 to vector<32x128xf32>
    %19 = arith.addf %18, %17 : vector<32x128xf32>
    %20 = arith.divf %18, %19 : vector<32x128xf32>
    %c0_12 = arith.constant 0 : index
    %c0_13 = arith.constant 0 : index
    %21 = vector.load %arg6[%c0_12, %c0_13] : memref<4x32xf32, #tpu.memory_space<vmem>>, vector<4x32xf32>
    %c0_14 = arith.constant 0 : index
    %c0_15 = arith.constant 0 : index
    %22 = vector.load %arg7[%c0_14, %c0_15] : memref<4x1xf32, #tpu.memory_space<vmem>>, vector<4x1xf32>
    %cst_16 = arith.constant dense<0.000000e+00> : vector<4x128xf32>
    %23 = tpu.matmul %21, %20, %cst_16 {dimension_numbers = #tpu.dot_dimension_numbers<[1], [0], [0], [1], [0, 0, 1, 1], [], []>} : vector<4x32xf32>, vector<32x128xf32>, vector<4x128xf32> -> vector<4x128xf32>
    %24 = vector.broadcast %22 : vector<4x1xf32> to vector<4x128xf32>
    %25 = arith.addf %23, %24 : vector<4x128xf32>
    %cst_17 = arith.constant dense<0xFF800000> : vector<128xf32>
    %26 = vector.multi_reduction <maximumf>, %25, %cst_17 [0] : vector<4x128xf32> to vector<128xf32>
    %27 = vector.shape_cast %26 : vector<128xf32> to vector<1x128xf32>
    %28 = vector.broadcast %27 : vector<1x128xf32> to vector<4x128xf32>
    %29 = arith.subf %25, %28 : vector<4x128xf32>
    %30 = math.exp %29 : vector<4x128xf32>
    %cst_18 = arith.constant dense<0.000000e+00> : vector<128xf32>
    %31 = vector.multi_reduction <add>, %30, %cst_18 [0] : vector<4x128xf32> to vector<128xf32>
    %32 = vector.shape_cast %31 : vector<128xf32> to vector<1x128xf32>
    %33 = vector.broadcast %32 : vector<1x128xf32> to vector<4x128xf32>
    %34 = arith.divf %30, %33 : vector<4x128xf32>
    %c0_19 = arith.constant 0 : index
    %c0_20 = arith.constant 0 : index
    %35 = vector.load %arg8[%c0_19, %c0_20] : memref<4x128xf32, #tpu.memory_space<vmem>>, vector<4x128xf32>
    tpu.vector_store %arg8[%c0_19, %c0_20], %34 {strides = array<i32>} : memref<4x128xf32, #tpu.memory_space<vmem>>, vector<4x128xf32>,
    return
  }
  func.func @transform_0(%arg0: i32) -> (i32, i32) {
    %c0_i32 = arith.constant 0 : i32
    %c0_i32_0 = arith.constant 0 : i32
    return %c0_i32, %arg0 : i32, i32
  }
  func.func @transform_1(%arg0: i32) -> (i32, i32) {
    %c0_i32 = arith.constant 0 : i32
    %c0_i32_0 = arith.constant 0 : i32
    %c0_i32_1 = arith.constant 0 : i32
    return %c0_i32, %c0_i32_0 : i32, i32
  }
  func.func @transform_2(%arg0: i32) -> (i32, i32) {
    %c0_i32 = arith.constant 0 : i32
    %c0_i32_0 = arith.constant 0 : i32
    %c0_i32_1 = arith.constant 0 : i32
    return %c0_i32, %c0_i32_0 : i32, i32
  }
  func.func @transform_3(%arg0: i32) -> (i32, i32) {
    %c0_i32 = arith.constant 0 : i32
    %c0_i32_0 = arith.constant 0 : i32
    %c0_i32_1 = arith.constant 0 : i32
    return %c0_i32, %c0_i32_0 : i32, i32
  }
  func.func @transform_4(%arg0: i32) -> (i32, i32) {
    %c0_i32 = arith.constant 0 : i32
    %c0_i32_0 = arith.constant 0 : i32
    %c0_i32_1 = arith.constant 0 : i32
    return %c0_i32, %c0_i32_0 : i32, i32
  }
  func.func @transform_5(%arg0: i32) -> (i32, i32) {
    %c0_i32 = arith.constant 0 : i32
    %c0_i32_0 = arith.constant 0 : i32
    %c0_i32_1 = arith.constant 0 : i32
    return %c0_i32, %c0_i32_0 : i32, i32
  }
  func.func @transform_6(%arg0: i32) -> (i32, i32) {
    %c0_i32 = arith.constant 0 : i32
    %c0_i32_0 = arith.constant 0 : i32
    %c0_i32_1 = arith.constant 0 : i32
    return %c0_i32, %c0_i32_0 : i32, i32
  }
  func.func @transform_7(%arg0: i32) -> (i32, i32) {
    %c0_i32 = arith.constant 0 : i32
    %c0_i32_0 = arith.constant 0 : i32
    return %c0_i32, %arg0 : i32, i32
  }
}

</mosaic_0001>

<llo_original>
// kernel: tpu_custom_call.1
$region0: #{tpu_custom_call.1}
  #allocation0 [shape = 'u32[]', space=smem, size = 0x4, offset = 0x4, fixed_abs, tag = 'smem constant byte address 0x4 - core index']
  #allocation1 [shape = 'u32[72,128]{1,0:T(1,128)}', space=vmem, size = 0x9000, scoped, tag = 'internal scratch']
  %s0 = inlined_call_operand.vmem [shape: f32[16,128], index: 0, kind: input, shape index: {}]
  %s1 = inlined_call_operand.vmem [shape: f32[32,16], index: 1, kind: input, shape index: {}]
  %s2 = inlined_call_operand.vmem [shape: f32[32,1], index: 2, kind: input, shape index: {}]
  %s3 = inlined_call_operand.vmem [shape: f32[32,32], index: 3, kind: input, shape index: {}]
  %s4 = inlined_call_operand.vmem [shape: f32[32,1], index: 4, kind: input, shape index: {}]
  %s5 = inlined_call_operand.vmem [shape: f32[4,32], index: 5, kind: input, shape index: {}]
  %s6 = inlined_call_operand.vmem [shape: f32[4,1], index: 6, kind: input, shape index: {}]
  %s7 = inlined_call_operand.hbm [shape: f32[4,128], index: 7, kind: output, shape index: {}]
  %s8 = sld [smem:[#allocation0]]
  $region38: #{tpu_custom_call.1} parent=0
    _
  %s10 = ssub.s32 1, %s8
  %s11 = scalar_select 0, %s10, %s8
  $region1: #{tpu_custom_call.1} parent=0
    #allocation2 [shape = 'u8[2048]{0}', space=vmem, size = 0x800, scoped, tag = 'output window, operand 0, single buffered']
    #allocation3 [shape = 's32[1]{0}', space=sflag, size = 0x4, scoped, tag = 'scoped memory for tpu_custom_call.1']
    %12 = vsyncpa [#allocation3], 0
    // Predicated region
    $region2: #{tpu_custom_call.1} parent=1 // pred_check
      _
    $region3: #{tpu_custom_call.1} parent=1 // pred_check_branch
      %14 = sbr.rel (0) target = $region5
    $region4: #{tpu_custom_call.1} parent=1 // pred_region
      _
    $region5: #{tpu_custom_call.1} parent=1 // pred_fallthru
      _
    // Predicated region
    $region6: #{tpu_custom_call.1} parent=1 // pred_check
      _
    $region7: #{tpu_custom_call.1} parent=1 // pred_check_branch
      %16 = sbr.rel (0) target = $region9
    $region8: #{tpu_custom_call.1} parent=1 // pred_region
      _
    $region9: #{tpu_custom_call.1} parent=1 // pred_fallthru
      _
    // Predicated region
    $region10: #{tpu_custom_call.1} parent=1 // pred_check
      _
    $region11: #{tpu_custom_call.1} parent=1 // pred_check_branch
      %18 = sbr.rel (0) target = $region13
    $region12: #{tpu_custom_call.1} parent=1 // pred_region
      _
    $region13: #{tpu_custom_call.1} parent=1 // pred_fallthru
      _
    // Predicated region
    $region14: #{tpu_custom_call.1} parent=1 // pred_check
      _
    $region15: #{tpu_custom_call.1} parent=1 // pred_check_branch
      %20 = sbr.rel (0) target = $region17
    $region16: #{tpu_custom_call.1} parent=1 // pred_region
      _
    $region17: #{tpu_custom_call.1} parent=1 // pred_fallthru
      _
    // Predicated region
    $region18: #{tpu_custom_call.1} parent=1 // pred_check
      _
    $region19: #{tpu_custom_call.1} parent=1 // pred_check_branch
      %22 = sbr.rel (0) target = $region21
    $region20: #{tpu_custom_call.1} parent=1 // pred_region
      _
    $region21: #{tpu_custom_call.1} parent=1 // pred_fallthru
      _
    // Predicated region
    $region22: #{tpu_custom_call.1} parent=1 // pred_check
      _
    $region23: #{tpu_custom_call.1} parent=1 // pred_check_branch
      %24 = sbr.rel (0) target = $region25
    $region24: #{tpu_custom_call.1} parent=1 // pred_region
      _
    $region25: #{tpu_custom_call.1} parent=1 // pred_fallthru
      _
    // Predicated region
    $region26: #{tpu_custom_call.1} parent=1 // pred_check
      _
    $region27: #{tpu_custom_call.1} parent=1 // pred_check_branch
      %26 = sbr.rel (0) target = $region29
    $region28: #{tpu_custom_call.1} parent=1 // pred_region
      _
    $region29: #{tpu_custom_call.1} parent=1 // pred_fallthru
      _
    %v27 = vld [vmem:[%s0] sm:$0xff]
    %v28 = vld [vmem:[%s0 + $0x8] sm:$0xff]
    %v29 = vld [vmem:[%s1] sm:$0xff]
    %v30 = vld [vmem:[%s1 + $0x8] sm:$0xff]
    %v31 = vld [vmem:[%s1 + $0x10] sm:$0xff]
    %v32 = vld [vmem:[%s1 + $0x18] sm:$0xff]
    %v33 = vld [vmem:[%s2] sm:$0xff]
    %v34 = vld [vmem:[%s2 + $0x8] sm:$0xff]
    %v35 = vld [vmem:[%s2 + $0x10] sm:$0xff]
    %v36 = vld [vmem:[%s2 + $0x18] sm:$0xff]
    %38 = vset.pattern.permute.xlu0 0
    %39 = vperm.xlu0 %38, %v33
    %v40 = vpop.permute.xlu0 %39
    %43 = vset.pattern.permute.xlu0 0
    %44 = vperm.xlu0 %43, %v34
    %v45 = vpop.permute.xlu0 %44
    %48 = vset.pattern.permute.xlu0 0
    %49 = vperm.xlu0 %48, %v35
    %v50 = vpop.permute.xlu0 %49
    %53 = vset.pattern.permute.xlu0 0
    %54 = vperm.xlu0 %53, %v36
    %v55 = vpop.permute.xlu0 %54
    %vm57 = vcmask 130048
    %v59 = vsel %vm57, %v29, 0
    %v62 = vsel %vm57, %v30, 0
    %v65 = vsel %vm57, %v31, 0
    %v68 = vsel %vm57, %v32, 0
    %70 = vmatpush.msra.mxu0 0.0
    %71 = vmatpush.msra.mxu0 0.0
    %72 = vmatpush.msra.mxu0 0.0
    %73 = vmatpush.msra.mxu0 0.0
    %74 = vmatpush.msra.mxu0 0.0
    %75 = vmatpush.msra.mxu0 0.0
    %76 = vmatpush.msra.mxu0 0.0
    %77 = vmatpush.msra.mxu0 0.0
    %78 = vmatpush.msra.mxu0 0.0
    %79 = vmatpush.msra.mxu0 0.0
    %80 = vmatpush.msra.mxu0 0.0
    %81 = vmatpush.msra.mxu0 0.0
    %82 = vmatpush.msra.mxu0 0.0
    %83 = vmatpush.msra.mxu0 0.0
    %84 = vmatpush.msra.mxu0 %v28
    %85 = vmatpush.msra.mxu0 %v27
    %86 = vmatmul.f32.gmra.mxu0 %v59
    %v87 = vpop.f32.mrf.mxu0
    %v88 = vadd.f32 %v40, %v87
    %89 = vmatmul.f32.gmra.mxu0 %v62
    %v90 = vpop.f32.mrf.mxu0
    %v91 = vadd.f32 %v45, %v90
    %92 = vmatmul.f32.gmra.mxu0 %v65
    %v93 = vpop.f32.mrf.mxu0
    %v94 = vadd.f32 %v50, %v93
    %95 = vmatmul.f32.gmra.mxu0 %v68
    %v96 = vpop.f32.mrf.mxu0
    %v97 = vadd.f32 %v55, %v96
    %98 = vdwg.mxu0
    %v99 = vxor.u32 %v88, 2147483648
    %v100 = vxor.u32 %v91, 2147483648
    %v101 = vxor.u32 %v94, 2147483648
    %v102 = vxor.u32 %v97, 2147483648
    %v103 = vmul.f32 %v99, 1.442695
    %v104 = vpow.pop %v103
    %v105 = vmul.f32 %v100, 1.442695
    %v106 = vpow.pop %v105
    %v107 = vmul.f32 %v101, 1.442695
    %v108 = vpow.pop %v107
    %v109 = vmul.f32 %v102, 1.442695
    %v110 = vpow.pop %v109
    %v111 = vadd.f32 %v104, 1.0
    %v112 = vadd.f32 %v106, 1.0
    %v113 = vadd.f32 %v108, 1.0
    %v114 = vadd.f32 %v110, 1.0
    %v115 = vrcp.pop %v111
    %v116 = vmul.f32 %v111, %v115
    %v117 = vsub.f32 1.0, %v116
    %v118 = vmul.f32 %v115, %v117
    %v119 = vadd.f32 %v115, %v118
    %vm120 = vweird.f32 %v111
    %vm121 = vweird.f32 %v115
    %vm122 = vmor %vm120, %vm121
    %v123 = vsel %vm122, %v115, %v119
    %v124 = vand.u32 2147483647, %v111
    %vm125 = vcmp.eq.f32.partialorder %v124, 8.507059e+37
    %v126 = vand.u32 %v111, 2147483648
    %v127 = vor.u32 1.1754944e-38, %v126
    %v128 = vsel %vm125, %v127, %v123
    %v129 = vmul.f32 1.0, %v128
    %v130 = vrcp.pop %v112
    %v131 = vmul.f32 %v112, %v130
    %v132 = vsub.f32 1.0, %v131
    %v133 = vmul.f32 %v130, %v132
    %v134 = vadd.f32 %v130, %v133
    %vm135 = vweird.f32 %v112
    %vm136 = vweird.f32 %v130
    %vm137 = vmor %vm135, %vm136
    %v138 = vsel %vm137, %v130, %v134
    %v139 = vand.u32 2147483647, %v112
    %vm140 = vcmp.eq.f32.partialorder %v139, 8.507059e+37
    %v141 = vand.u32 %v112, 2147483648
    %v142 = vor.u32 1.1754944e-38, %v141
    %v143 = vsel %vm140, %v142, %v138
    %v144 = vmul.f32 1.0, %v143
    %v145 = vrcp.pop %v113
    %v146 = vmul.f32 %v113, %v145
    %v147 = vsub.f32 1.0, %v146
    %v148 = vmul.f32 %v145, %v147
    %v149 = vadd.f32 %v145, %v148
    %vm150 = vweird.f32 %v113
    %vm151 = vweird.f32 %v145
    %vm152 = vmor %vm150, %vm151
    %v153 = vsel %vm152, %v145, %v149
    %v154 = vand.u32 2147483647, %v113
    %vm155 = vcmp.eq.f32.partialorder %v154, 8.507059e+37
    %v156 = vand.u32 %v113, 2147483648
    %v157 = vor.u32 1.1754944e-38, %v156
    %v158 = vsel %vm155, %v157, %v153
    %v159 = vmul.f32 1.0, %v158
    %v160 = vrcp.pop %v114
    %v161 = vmul.f32 %v114, %v160
    %v162 = vsub.f32 1.0, %v161
    %v163 = vmul.f32 %v160, %v162
    %v164 = vadd.f32 %v160, %v163
    %vm165 = vweird.f32 %v114
    %vm166 = vweird.f32 %v160
    %vm167 = vmor %vm165, %vm166
    %v168 = vsel %vm167, %v160, %v164
    %v169 = vand.u32 2147483647, %v114
    %vm170 = vcmp.eq.f32.partialorder %v169, 8.507059e+37
    %v171 = vand.u32 %v114, 2147483648
    %v172 = vor.u32 1.1754944e-38, %v171
    %v173 = vsel %vm170, %v172, %v168
    %v174 = vmul.f32 1.0, %v173
    %v175 = vld [vmem:[%s3] sm:$0xff]
    %v176 = vld [vmem:[%s3 + $0x8] sm:$0xff]
    %v177 = vld [vmem:[%s3 + $0x10] sm:$0xff]
    %v178 = vld [vmem:[%s3 + $0x18] sm:$0xff]
    %v179 = vld [vmem:[%s4] sm:$0xff]
    %v180 = vld [vmem:[%s4 + $0x8] sm:$0xff]
    %v181 = vld [vmem:[%s4 + $0x10] sm:$0xff]
    %v182 = vld [vmem:[%s4 + $0x18] sm:$0xff]
    %184 = vset.pattern.permute.xlu0 0
    %185 = vperm.xlu0 %184, %v179
    %v186 = vpop.permute.xlu0 %185
    %189 = vset.pattern.permute.xlu0 0
    %190 = vperm.xlu0 %189, %v180
    %v191 = vpop.permute.xlu0 %190
    %194 = vset.pattern.permute.xlu0 0
    %195 = vperm.xlu0 %194, %v181
    %v196 = vpop.permute.xlu0 %195
    %199 = vset.pattern.permute.xlu0 0
    %200 = vperm.xlu0 %199, %v182
    %v201 = vpop.permute.xlu0 %200
    %vm203 = vcmask 261120
    %v205 = vsel %vm203, %v175, 0
    %v208 = vsel %vm203, %v176, 0
    %v211 = vsel %vm203, %v177, 0
    %v214 = vsel %vm203, %v178, 0
    %216 = vmatpush.msra.mxu0 0.0
    %217 = vmatpush.msra.mxu0 0.0
    %218 = vmatpush.msra.mxu0 0.0
    %219 = vmatpush.msra.mxu0 0.0
    %220 = vmatpush.msra.mxu0 0.0
    %221 = vmatpush.msra.mxu0 0.0
    %222 = vmatpush.msra.mxu0 0.0
    %223 = vmatpush.msra.mxu0 0.0
    %224 = vmatpush.msra.mxu0 0.0
    %225 = vmatpush.msra.mxu0 0.0
    %226 = vmatpush.msra.mxu0 0.0
    %227 = vmatpush.msra.mxu0 0.0
    %228 = vmatpush.msra.mxu0 %v174
    %229 = vmatpush.msra.mxu0 %v159
    %230 = vmatpush.msra.mxu0 %v144
    %231 = vmatpush.msra.mxu0 %v129
    %232 = vmatmul.f32.gmra.mxu0 %v205
    %v233 = vpop.f32.mrf.mxu0
    %v234 = vadd.f32 %v186, %v233
    %235 = vmatmul.f32.gmra.mxu0 %v208
    %v236 = vpop.f32.mrf.mxu0
    %v237 = vadd.f32 %v191, %v236
    %238 = vmatmul.f32.gmra.mxu0 %v211
    %v239 = vpop.f32.mrf.mxu0
    %v240 = vadd.f32 %v196, %v239
    %241 = vmatmul.f32.gmra.mxu0 %v214
    %v242 = vpop.f32.mrf.mxu0
    %v243 = vadd.f32 %v201, %v242
    %244 = vdwg.mxu0
    %v245 = vxor.u32 %v234, 2147483648
    %v246 = vxor.u32 %v237, 2147483648
    %v247 = vxor.u32 %v240, 2147483648
    %v248 = vxor.u32 %v243, 2147483648
    %v249 = vmul.f32 %v245, 1.442695
    %v250 = vpow.pop %v249
    %v251 = vmul.f32 %v246, 1.442695
    %v252 = vpow.pop %v251
    %v253 = vmul.f32 %v247, 1.442695
    %v254 = vpow.pop %v253
    %v255 = vmul.f32 %v248, 1.442695
    %v256 = vpow.pop %v255
    %v257 = vadd.f32 %v250, 1.0
    %v258 = vadd.f32 %v252, 1.0
    %v259 = vadd.f32 %v254, 1.0
    %v260 = vadd.f32 %v256, 1.0
    %v261 = vrcp.pop %v257
    %v262 = vmul.f32 %v257, %v261
    %v263 = vsub.f32 1.0, %v262
    %v264 = vmul.f32 %v261, %v263
    %v265 = vadd.f32 %v261, %v264
    %vm266 = vweird.f32 %v257
    %vm267 = vweird.f32 %v261
    %vm268 = vmor %vm266, %vm267
    %v269 = vsel %vm268, %v261, %v265
    %v270 = vand.u32 2147483647, %v257
    %vm271 = vcmp.eq.f32.partialorder %v270, 8.507059e+37
    %v272 = vand.u32 %v257, 2147483648
    %v273 = vor.u32 1.1754944e-38, %v272
    %v274 = vsel %vm271, %v273, %v269
    %v275 = vmul.f32 1.0, %v274
    %v276 = vrcp.pop %v258
    %v277 = vmul.f32 %v258, %v276
    %v278 = vsub.f32 1.0, %v277
    %v279 = vmul.f32 %v276, %v278
    %v280 = vadd.f32 %v276, %v279
    %vm281 = vweird.f32 %v258
    %vm282 = vweird.f32 %v276
    %vm283 = vmor %vm281, %vm282
    %v284 = vsel %vm283, %v276, %v280
    %v285 = vand.u32 2147483647, %v258
    %vm286 = vcmp.eq.f32.partialorder %v285, 8.507059e+37
    %v287 = vand.u32 %v258, 2147483648
    %v288 = vor.u32 1.1754944e-38, %v287
    %v289 = vsel %vm286, %v288, %v284
    %v290 = vmul.f32 1.0, %v289
    %v291 = vrcp.pop %v259
    %v292 = vmul.f32 %v259, %v291
    %v293 = vsub.f32 1.0, %v292
    %v294 = vmul.f32 %v291, %v293
    %v295 = vadd.f32 %v291, %v294
    %vm296 = vweird.f32 %v259
    %vm297 = vweird.f32 %v291
    %vm298 = vmor %vm296, %vm297
    %v299 = vsel %vm298, %v291, %v295
    %v300 = vand.u32 2147483647, %v259
    %vm301 = vcmp.eq.f32.partialorder %v300, 8.507059e+37
    %v302 = vand.u32 %v259, 2147483648
    %v303 = vor.u32 1.1754944e-38, %v302
    %v304 = vsel %vm301, %v303, %v299
    %v305 = vmul.f32 1.0, %v304
    %v306 = vrcp.pop %v260
    %v307 = vmul.f32 %v260, %v306
    %v308 = vsub.f32 1.0, %v307
    %v309 = vmul.f32 %v306, %v308
    %v310 = vadd.f32 %v306, %v309
    %vm311 = vweird.f32 %v260
    %vm312 = vweird.f32 %v306
    %vm313 = vmor %vm311, %vm312
    %v314 = vsel %vm313, %v306, %v310
    %v315 = vand.u32 2147483647, %v260
    %vm316 = vcmp.eq.f32.partialorder %v315, 8.507059e+37
    %v317 = vand.u32 %v260, 2147483648
    %v318 = vor.u32 1.1754944e-38, %v317
    %v319 = vsel %vm316, %v318, %v314
    %v320 = vmul.f32 1.0, %v319
    %v321 = vld [vmem:[%s5] sm:$0xf]
    %v322 = vld [vmem:[%s6] sm:$0xf]
    %324 = vset.pattern.permute.xlu0 0
    %325 = vperm.xlu0 %324, %v322
    %v326 = vpop.permute.xlu0 %325
    %v329 = vsel %vm203, %v321, 0
    %331 = vmatpush.msra.mxu0 0.0
    %332 = vmatpush.msra.mxu0 0.0
    %333 = vmatpush.msra.mxu0 0.0
    %334 = vmatpush.msra.mxu0 0.0
    %335 = vmatpush.msra.mxu0 0.0
    %336 = vmatpush.msra.mxu0 0.0
    %337 = vmatpush.msra.mxu0 0.0
    %338 = vmatpush.msra.mxu0 0.0
    %339 = vmatpush.msra.mxu0 0.0
    %340 = vmatpush.msra.mxu0 0.0
    %341 = vmatpush.msra.mxu0 0.0
    %342 = vmatpush.msra.mxu0 0.0
    %343 = vmatpush.msra.mxu0 %v320
    %344 = vmatpush.msra.mxu0 %v305
    %345 = vmatpush.msra.mxu0 %v290
    %346 = vmatpush.msra.mxu0 %v275
    %347 = vmatmul.f32.gmra.mxu0 %v329
    %v348 = vpop.f32.mrf.mxu0
    %v349 = vadd.f32 %v326, %v348
    %350 = vdwg.mxu0
    %vm351 = vcmask 1043456
    %v352 = vsel %vm351, %v349, -inf
    %v353 = vrot.slane %v352, 4
    %v354 = vmax.f32 %v352, %v353
    %v355 = vrot.slane %v354, 2
    %v356 = vmax.f32 %v354, %v355
    %v357 = vrot.slane %v356, 1
    %v358 = vmax.f32 %v356, %v357
    %v359 = vsub.f32 %v349, %v358
    %v360 = vmul.f32 %v359, 1.442695
    %v361 = vpow.pop %v360
    %v362 = vsel %vm351, %v361, 0.0
    %v363 = vrot.slane %v362, 4
    %v364 = vadd.f32 %v362, %v363
    %v365 = vrot.slane %v364, 2
    %v366 = vadd.f32 %v364, %v365
    %v367 = vrot.slane %v366, 1
    %v368 = vadd.f32 %v366, %v367
    %v369 = vrcp.pop %v368
    %v370 = vmul.f32 %v368, %v369
    %v371 = vsub.f32 1.0, %v370
    %v372 = vmul.f32 %v369, %v371
    %v373 = vadd.f32 %v369, %v372
    %vm374 = vweird.f32 %v368
    %vm375 = vweird.f32 %v369
    %vm376 = vmor %vm374, %vm375
    %v377 = vsel %vm376, %v369, %v373
    %v378 = vand.u32 2147483647, %v368
    %vm379 = vcmp.eq.f32.partialorder %v378, 8.507059e+37
    %v380 = vand.u32 %v368, 2147483648
    %v381 = vor.u32 1.1754944e-38, %v380
    %v382 = vsel %vm379, %v381, %v377
    %v383 = vmul.f32 %v361, %v382
    %384 = vst [vmem:[#allocation2] sm:$0xf] %v383
    // Predicated region
    $region30: #{tpu_custom_call.1} parent=1 // pred_check
      _
    $region31: #{tpu_custom_call.1} parent=1 // pred_check_branch
      %386 = sbr.rel (0) target = $region33
    $region32: #{tpu_custom_call.1} parent=1 // pred_region
      %388 = vsyncadd [#allocation3], 0
      %s390 = sshll.u32 [#allocation2], 4
      %s391 = int_to_ptr.vmem [resolvable:$true] %s390
      %s392 = sshll.u32 %s7, 4
      %s393 = int_to_ptr.hbm [resolvable:$true] %s392
      %395 = dma.vmem_to_hbm [thread:$0]  %s391, 64, %s393, [#allocation3]
    $region33: #{tpu_custom_call.1} parent=1 // pred_fallthru
      _
    // Predicated region
    $region34: #{tpu_custom_call.1} parent=1 // pred_check
      _
    $region35: #{tpu_custom_call.1} parent=1 // pred_check_branch
      %397 = sbr.rel (0) target = $region37
    $region36: #{tpu_custom_call.1} parent=1 // pred_region
      %399 = dma.done [#allocation3], 64
    $region37: #{tpu_custom_call.1} parent=1 // pred_fallthru
      _
    %400 = vsyncpa [#allocation3], 1

</llo_original>
